<compile_context>
chip_gen: v7x
topology: tpu7x:2x2x1
jax: 0.10.0
libtpu: 0.0.40
codegen_flags: <defaults>
</compile_context>

<pallas_src>
import functools
import math

import jax
import jax.numpy as jnp
from jax import lax
from jax.experimental import pallas as pl
from jax.experimental.pallas import tpu as pltpu


def dnl_kernel(x_ref, k_ref, v_ref, wq_ref, bq_ref, gamma_ref, o_ref, *,
               inv_scale, c_out, exp_dtype):
    """One (batch, query-tile) grid step, channel-major.

    x_ref : (C,    TN)  query tile of the full-res image (residual source)
    k_ref : (Cqp,  M)   bf16 key projection (constant across query tiles of b)
    v_ref : (Cpad, M)   bf16 value projection + ones row at index c_out
    """
    x = x_ref[...]                                                # (C, TN)

    # Q projection on the MXU with bf16 operands; fold 1/(sqrt(Cq)*temp) here
    # (Cqp*TN elements instead of a full pass over the (M, TN) score matrix).
    q = jnp.dot(wq_ref[...], x.astype(jnp.bfloat16),
                preferred_element_type=jnp.float32)
    q = ((q + bq_ref[...]) * inv_scale).astype(jnp.bfloat16)      # (Cqp, TN)

    # sim[m, n] = sum_cq k[cq, m] * q[cq, n]  — key-major so the softmax stats
    # land lane-major and the PV matmul below needs no transpose.
    sim = lax.dot_general(k_ref[...], q, (((0,), (0,)), ((), ())),
                          preferred_element_type=jnp.float32)     # (M, TN)

    # Softmax over the key axis (axis 0 here == dim=2 of the PyTorch (B,N,M)).
    m_max = jnp.max(sim, axis=0, keepdims=True)                   # (1, TN)
    p = jnp.exp((sim - m_max).astype(exp_dtype)).astype(jnp.bfloat16)

    # V carries an all-ones row at index c_out, so this single bf16 MXU dot
    # produces both the weighted values and the softmax denominator.
    acc = jnp.dot(v_ref[...], p, preferred_element_type=jnp.float32)  # (Cpad, TN)
    attn = acc[:c_out, :]                                         # (C, TN)
    denom = acc[c_out:c_out + 1, :]                               # (1, TN)

    scale = gamma_ref[0] * pl.reciprocal(denom, approx=True)      # (1, TN)
    o_ref[...] = (attn * scale + x).astype(o_ref.dtype)


def _round_up(v, m):
    return -(-v // m) * m


def _vmem_limits():
    """Per-generation (limit_for_compiler, budget_for_tile_picking) in bytes."""
    phys = None
    try:
        phys = getattr(pltpu.get_tpu_info(), "vmem_capacity_bytes", None)
    except Exception:
        phys = None
    if phys is None:
        phys = 64 * 1024 * 1024                      # conservative default
    if phys >= 96 * 1024 * 1024:                     # v5e / v6e: 128 MiB per TC
        limit = 100 * 1024 * 1024
    else:                                            # v7x: 64 MiB per TC
        limit = 44 * 1024 * 1024
    return limit, limit - 6 * 1024 * 1024            # headroom: Mosaic scratch


def _use_bf16_exp():
    """bf16 EUP exists on v6e/v7x; keep f32 exp elsewhere (and when unknown)."""
    try:
        kind = jax.devices()[0].device_kind.lower()
    except Exception:
        return False
    return ("v6" in kind) or ("v7" in kind)


def _pick_tile_n(N, M, C, Cpad, Cqp, budget_bytes):
    """Largest lane-aligned query tile whose working set fits the VMEM budget.

    Resident: bf16 K/V inputs (double-buffered by the pipeline) + weights.
    Per-step: f32 x/out tiles (double-buffered), f32 sim, bf16 p, q, acc.
    """
    resident = 2 * 2 * (Cqp + Cpad) * M + 2 * 4 * Cqp * (C + 1)

    def step_bytes(tn):
        return (16 * C * tn          # x + out tiles, f32, double-buffered
                + 4 * M * tn         # sim (f32)
                + 2 * M * tn         # p (bf16)
                + 6 * Cqp * tn       # q (f32 + bf16 copy)
                + 4 * Cpad * tn)     # attn + denom rows (f32)

    # Larger tiles preferred (fewer grid steps, 256-wide MXU kept full on
    # v6e/v7x); 128 is a last resort for shapes nothing larger divides.
    for tn in (2048, 1024, 512, 256, 128):
        if N % tn == 0 and resident + step_bytes(tn) <= budget_bytes:
            return tn
    if resident + step_bytes(N) <= budget_bytes:
        return N                     # tiny/odd inputs: single full-width block
    # TODO(synk): add an M-tiled online-softmax (flash-style) fallback for
    # configurations whose resident K/V footprint alone exceeds the budget.
    raise ValueError("DNL Pallas kernel: working set does not fit the VMEM "
                     "budget; an M-tiled variant is required for this shape.")


def dnl_forward(x, wq, bq, wk, bk, wv, gamma, *, temp=1.0, tile_n=None):
    """DNL forward at default ctor args.

    x: NCHW float. Weights are (C_out, C_in) (PyTorch 1x1 conv weights with the
    trailing 1x1 dims squeezed). Returns NCHW, same shape/dtype as x.
    """
    B, C, H, W = x.shape
    Cq = wq.shape[0]
    assert H % 2 == 0 and W % 2 == 0

    N = H * W
    M = (H // 2) * (W // 2)
    f32 = jnp.float32

    # Pad the query/key channel dim to a sublane multiple (MXU-friendly; the
    # extra rows are zeros so the sim contraction is unchanged), and size the
    # augmented V (values + ones row + zero padding) to a multiple of 8.
    Cqp = _round_up(max(Cq, 8), 8)
    Cpad = _round_up(C + 1, 8)

    wq_p = jnp.zeros((Cqp, C), f32).at[:Cq].set(wq.astype(f32))
    bq_p = jnp.zeros((Cqp, 1), f32).at[:Cq, 0].set(bq.astype(f32))
    wk_p = jnp.zeros((Cqp, C), f32).at[:Cq].set(wk.astype(f32))
    bk_p = jnp.zeros((Cqp,), f32).at[:Cq].set(bk.astype(f32))

    # self.downsample is unconditionally MaxPool2d(2,2) in the module.
    xd = x.astype(f32).reshape(B, C, H // 2, 2, W // 2, 2).max(axis=(3, 5))
    xd = xd.reshape(B, C, M)

    # K / V projections are tiny (O(C*Cq*M) flops); computing them once here as
    # plain XLA ops lets both grid axes be "parallel" (v7x megacore at any B)
    # and removes the per-batch prologue + pooled-image residency in VMEM.
    k = jnp.einsum('oc,bcm->bom', wk_p, xd) + bk_p[None, :, None]   # (B,Cqp,M)
    v = jnp.einsum('oc,bcm->bom', wv.astype(f32), xd)               # (B,C,  M)
    v_aug = jnp.concatenate(
        [v, jnp.ones((B, 1, M), f32), jnp.zeros((B, Cpad - C - 1, M), f32)],
        axis=1)                                                     # (B,Cpad,M)
    k = k.astype(jnp.bfloat16)
    v_aug = v_aug.astype(jnp.bfloat16)

    # Channel-major (B, C, N): plain reshape of NCHW — no HBM transpose passes.
    x_cn = x.reshape(B, C, N)

    vmem_limit, budget = _vmem_limits()
    if tile_n is None:
        tile_n = _pick_tile_n(N, M, C, Cpad, Cqp, budget)
    assert N % tile_n == 0, "tile_n must divide H*W"
    n_tiles = N // tile_n

    inv_scale = 1.0 / (math.sqrt(Cq) * temp)
    exp_dtype = jnp.bfloat16 if _use_bf16_exp() else jnp.float32
    kernel = functools.partial(dnl_kernel, inv_scale=inv_scale, c_out=C,
                               exp_dtype=exp_dtype)

    cost = pl.CostEstimate(
        flops=2 * B * N * (Cqp * C + M * (Cqp + Cpad)),
        transcendentals=B * N * M,
        bytes_accessed=8 * B * C * N + 2 * B * M * (Cqp + Cpad),
    )

    out = pl.pallas_call(
        kernel,
        out_shape=jax.ShapeDtypeStruct((B, C, N), x.dtype),
        grid=(B, n_tiles),
        in_specs=[
            pl.BlockSpec((None, C, tile_n), lambda b, n: (b, 0, n)),   # x tile
            pl.BlockSpec((None, Cqp, M), lambda b, n: (b, 0, 0)),      # K  (bf16)
            pl.BlockSpec((None, Cpad, M), lambda b, n: (b, 0, 0)),     # V+1 (bf16)
            pl.BlockSpec((Cqp, C), lambda b, n: (0, 0)),               # Wq (bf16)
            pl.BlockSpec((Cqp, 1), lambda b, n: (0, 0)),               # bq (f32)
            pl.BlockSpec(memory_space=pltpu.MemorySpace.SMEM),         # gamma
        ],
        out_specs=pl.BlockSpec((None, C, tile_n), lambda b, n: (b, 0, n)),
        compiler_params=pltpu.CompilerParams(
            # Both axes are independent now (K/V come from the wrapper), so the
            # query-tile axis can also be sharded across TensorCores (v7x).
            dimension_semantics=("parallel", "parallel"),
            vmem_limit_bytes=vmem_limit,
        ),
        cost_estimate=cost,
    )(x_cn, k, v_aug, wq_p.astype(jnp.bfloat16), bq_p,
      gamma.reshape(1).astype(f32))

    return out.reshape(B, C, H, W)


def dnl_reference(x, wq, bq, wk, bk, wv, gamma, *, temp=1.0):
    """Pure-JAX replica of the PyTorch forward (default config) for validation."""
    B, C, H, W = x.shape
    Cq = wq.shape[0]
    xd = x.reshape(B, C, H // 2, 2, W // 2, 2).max(axis=(3, 5))
    N, M = H * W, (H // 2) * (W // 2)
    q = jnp.einsum('oc,bcn->bon', wq, x.reshape(B, C, N)) + bq[None, :, None]
    k = jnp.einsum('oc,bcm->bom', wk, xd.reshape(B, C, M)) + bk[None, :, None]
    v = jnp.einsum('oc,bcm->bom', wv, xd.reshape(B, C, M))
    sim = jnp.einsum('bqn,bqm->bnm', q, k) / (math.sqrt(Cq) * temp)
    sim = jax.nn.softmax(sim, axis=2)
    out_sim = jnp.einsum('bnm,bcm->bcn', sim, v).reshape(B, C, H, W)
    return gamma[0] * out_sim + x


if __name__ == "__main__":
    key = jax.random.PRNGKey(0)
    k_x, k_wq, k_bq, k_wk, k_bk, k_wv = jax.random.split(key, 6)

    # Module config: inplanes=8, ratio=0.5 -> outplanes (Cq) = 4.
    B, C, H, W = 2, 8, 16, 16
    Cq = 4

    x = jax.random.normal(k_x, (B, C, H, W), dtype=jnp.float32)

    # 1x1-conv weights stored as (C_out, C_in) (PyTorch (C_out, C_in, 1, 1)
    # with the trailing dims squeezed).
    wq = 0.1 * jax.random.normal(k_wq, (Cq, C), dtype=jnp.float32)
    bq = 0.05 * jax.random.normal(k_bq, (Cq,), dtype=jnp.float32)
    wk = 0.1 * jax.random.normal(k_wk, (Cq, C), dtype=jnp.float32)
    bk = 0.05 * jax.random.normal(k_bk, (Cq,), dtype=jnp.float32)
    wv = 0.1 * jax.random.normal(k_wv, (C, C), dtype=jnp.float32)
    # PyTorch initializes gamma to zeros (output == residual); use a nonzero
    # deterministic value so the attention path is actually exercised.
    gamma = jnp.array([0.5], dtype=jnp.float32)

    # tile_n=128 -> 2 query tiles per image, exercising the multi-tile grid
    # with constant-index K/V reuse.
    out = dnl_forward(x, wq, bq, wk, bk, wv, gamma, temp=1.0, tile_n=128)
    out = jax.block_until_ready(out)

    ref = dnl_reference(x, wq, bq, wk, bk, wv, gamma, temp=1.0)
    assert out.shape == (B, C, H, W)
    max_err = jnp.max(jnp.abs(out - ref))
    # bf16 MXU operands / bf16 exp relax bit-parity vs the f32 reference.
    assert jnp.allclose(out, ref, rtol=1e-2, atol=1e-2), f"max err {max_err}"

    print("KERNEL_OK")
</pallas_src>

<mosaic_0001>
module attributes {stable_mosaic.version = 11 : i64} {
  func.func @dnl_kernel(%arg0: i32, %arg1: i32, %arg2: memref<1x8x128xf32, #tpu.memory_space<vmem>>, %arg3: memref<1x8x64xbf16, #tpu.memory_space<vmem>>, %arg4: memref<1x16x64xbf16, #tpu.memory_space<vmem>>, %arg5: memref<8x8xbf16, #tpu.memory_space<vmem>>, %arg6: memref<8x1xf32, #tpu.memory_space<vmem>>, %arg7: memref<1xf32, #tpu.memory_space<smem>>, %arg8: memref<1x8x128xf32, #tpu.memory_space<vmem>>) attributes {dimension_semantics = [#tpu.dimension_semantics<parallel>, #tpu.dimension_semantics<parallel>], iteration_bounds = array<i64: 2, 2>, scalar_prefetch = 0 : i64, scratch_operands = 0 : i64, tpu.core_type = #tpu.core_type<tc>, window_params = [{transform_indices = @transform_0, window_bounds = array<i64: 1, 8, 128>}, {transform_indices = @transform_1, window_bounds = array<i64: 1, 8, 64>}, {transform_indices = @transform_2, window_bounds = array<i64: 1, 16, 64>}, {pipeline_mode = #tpu.pipeline_mode<synchronous>, transform_indices = @transform_3, window_bounds = array<i64: 8, 8>}, {pipeline_mode = #tpu.pipeline_mode<synchronous>, transform_indices = @transform_4, window_bounds = array<i64: 8, 1>}, {transform_indices = @transform_5, window_bounds = array<i64: 1>}, {transform_indices = @transform_6, window_bounds = array<i64: 1, 8, 128>}]} {
    %c0 = arith.constant 0 : index
    %c0_0 = arith.constant 0 : index
    %c0_1 = arith.constant 0 : index
    %0 = vector.load %arg2[%c0, %c0_0, %c0_1] : memref<1x8x128xf32, #tpu.memory_space<vmem>>, vector<1x8x128xf32>
    %1 = vector.shape_cast %0 : vector<1x8x128xf32> to vector<8x128xf32>
    %c0_2 = arith.constant 0 : index
    %c0_3 = arith.constant 0 : index
    %2 = vector.load %arg5[%c0_2, %c0_3] : memref<8x8xbf16, #tpu.memory_space<vmem>>, vector<8x8xbf16>
    %3 = arith.truncf %1 : vector<8x128xf32> to vector<8x128xbf16>
    %cst = arith.constant dense<0.000000e+00> : vector<8x128xf32>
    %4 = tpu.matmul %2, %3, %cst {dimension_numbers = #tpu.dot_dimension_numbers<[1], [0], [0], [1], [0, 0, 1, 1], [], []>} : vector<8x8xbf16>, vector<8x128xbf16>, vector<8x128xf32> -> vector<8x128xf32>
    %c0_4 = arith.constant 0 : index
    %c0_5 = arith.constant 0 : index
    %5 = vector.load %arg6[%c0_4, %c0_5] : memref<8x1xf32, #tpu.memory_space<vmem>>, vector<8x1xf32>
    %6 = vector.broadcast %5 : vector<8x1xf32> to vector<8x128xf32>
    %7 = arith.addf %4, %6 : vector<8x128xf32>
    %cst_6 = arith.constant 5.000000e-01 : f32
    %8 = vector.broadcast %cst_6 : f32 to vector<8x128xf32>
    %9 = arith.mulf %7, %8 : vector<8x128xf32>
    %10 = arith.truncf %9 : vector<8x128xf32> to vector<8x128xbf16>
    %c0_7 = arith.constant 0 : index
    %c0_8 = arith.constant 0 : index
    %c0_9 = arith.constant 0 : index
    %11 = vector.load %arg3[%c0_7, %c0_8, %c0_9] : memref<1x8x64xbf16, #tpu.memory_space<vmem>>, vector<1x8x64xbf16>
    %12 = vector.shape_cast %11 : vector<1x8x64xbf16> to vector<8x64xbf16>
    %cst_10 = arith.constant dense<0.000000e+00> : vector<64x128xf32>
    %13 = tpu.matmul %12, %10, %cst_10 {dimension_numbers = #tpu.dot_dimension_numbers<[0], [0], [1], [1], [0, 1, 1, 1], [], []>} : vector<8x64xbf16>, vector<8x128xbf16>, vector<64x128xf32> -> vector<64x128xf32>
    %cst_11 = arith.constant dense<0xFF800000> : vector<128xf32>
    %14 = vector.multi_reduction <maximumf>, %13, %cst_11 [0] : vector<64x128xf32> to vector<128xf32>
    %15 = vector.shape_cast %14 : vector<128xf32> to vector<1x128xf32>
    %16 = vector.broadcast %15 : vector<1x128xf32> to vector<64x128xf32>
    %17 = arith.subf %13, %16 : vector<64x128xf32>
    %18 = math.exp %17 : vector<64x128xf32>
    %19 = arith.truncf %18 : vector<64x128xf32> to vector<64x128xbf16>
    %c0_12 = arith.constant 0 : index
    %c0_13 = arith.constant 0 : index
    %c0_14 = arith.constant 0 : index
    %20 = vector.load %arg4[%c0_12, %c0_13, %c0_14] : memref<1x16x64xbf16, #tpu.memory_space<vmem>>, vector<1x16x64xbf16>
    %21 = vector.shape_cast %20 : vector<1x16x64xbf16> to vector<16x64xbf16>
    %cst_15 = arith.constant dense<0.000000e+00> : vector<16x128xf32>
    %22 = tpu.matmul %21, %19, %cst_15 {dimension_numbers = #tpu.dot_dimension_numbers<[1], [0], [0], [1], [0, 0, 1, 1], [], []>} : vector<16x64xbf16>, vector<64x128xbf16>, vector<16x128xf32> -> vector<16x128xf32>
    %23 = vector.extract_strided_slice %22 {offsets = [0, 0], sizes = [8, 128], strides = [1, 1]} : vector<16x128xf32> to vector<8x128xf32>
    %24 = vector.extract_strided_slice %22 {offsets = [8, 0], sizes = [1, 128], strides = [1, 1]} : vector<16x128xf32> to vector<1x128xf32>
    %c0_16 = arith.constant 0 : index
    %25 = memref.load %arg7[%c0_16] : memref<1xf32, #tpu.memory_space<smem>>
    %26 = tpu.reciprocal %24 {approx = true} : vector<1x128xf32> -> vector<1x128xf32>
    %27 = vector.broadcast %25 : f32 to vector<1x128xf32>
    %28 = arith.mulf %27, %26 : vector<1x128xf32>
    %29 = vector.broadcast %28 : vector<1x128xf32> to vector<8x128xf32>
    %30 = arith.mulf %23, %29 : vector<8x128xf32>
    %31 = arith.addf %30, %1 : vector<8x128xf32>
    %c0_17 = arith.constant 0 : index
    %c0_18 = arith.constant 0 : index
    %c0_19 = arith.constant 0 : index
    %32 = vector.load %arg8[%c0_17, %c0_18, %c0_19] : memref<1x8x128xf32, #tpu.memory_space<vmem>>, vector<1x8x128xf32>
    %33 = vector.shape_cast %32 : vector<1x8x128xf32> to vector<8x128xf32>
    %34 = vector.shape_cast %31 : vector<8x128xf32> to vector<1x8x128xf32>
    tpu.vector_store %arg8[%c0_17, %c0_18, %c0_19], %34 {strides = array<i32>} : memref<1x8x128xf32, #tpu.memory_space<vmem>>, vector<1x8x128xf32>,
    return
  }
  func.func @transform_0(%arg0: i32, %arg1: i32) -> (i32, i32, i32) {
    %c0_i32 = arith.constant 0 : i32
    %c0_i32_0 = arith.constant 0 : i32
    return %arg0, %c0_i32, %arg1 : i32, i32, i32
  }
  func.func @transform_1(%arg0: i32, %arg1: i32) -> (i32, i32, i32) {
    %c0_i32 = arith.constant 0 : i32
    %c0_i32_0 = arith.constant 0 : i32
    %c0_i32_1 = arith.constant 0 : i32
    return %arg0, %c0_i32, %c0_i32_0 : i32, i32, i32
  }
  func.func @transform_2(%arg0: i32, %arg1: i32) -> (i32, i32, i32) {
    %c0_i32 = arith.constant 0 : i32
    %c0_i32_0 = arith.constant 0 : i32
    %c0_i32_1 = arith.constant 0 : i32
    return %arg0, %c0_i32, %c0_i32_0 : i32, i32, i32
  }
  func.func @transform_3(%arg0: i32, %arg1: i32) -> (i32, i32) {
    %c0_i32 = arith.constant 0 : i32
    %c0_i32_0 = arith.constant 0 : i32
    %c0_i32_1 = arith.constant 0 : i32
    return %c0_i32, %c0_i32_0 : i32, i32
  }
  func.func @transform_4(%arg0: i32, %arg1: i32) -> (i32, i32) {
    %c0_i32 = arith.constant 0 : i32
    %c0_i32_0 = arith.constant 0 : i32
    %c0_i32_1 = arith.constant 0 : i32
    return %c0_i32, %c0_i32_0 : i32, i32
  }
  func.func @transform_5(%arg0: i32, %arg1: i32) -> i32 {
    %c0_i32 = arith.constant 0 : i32
    %c0_i32_0 = arith.constant 0 : i32
    return %c0_i32 : i32
  }
  func.func @transform_6(%arg0: i32, %arg1: i32) -> (i32, i32, i32) {
    %c0_i32 = arith.constant 0 : i32
    %c0_i32_0 = arith.constant 0 : i32
    return %arg0, %c0_i32, %arg1 : i32, i32, i32
  }
}

</mosaic_0001>

<llo_original>
// kernel: tpu_custom_call.1
$region0: #{tpu_custom_call.1}
  #allocation0 [shape = 'u32[]', space=smem, size = 0x4, offset = 0x4, fixed_abs, tag = 'smem constant byte address 0x4 - core index']
  #allocation1 [shape = 'u32[144,128]{1,0:T(1,128)}', space=vmem, size = 0x12000, scoped, tag = 'internal scratch']
  #allocation2 [shape = 'f32[1]{0:T(128)S(6)}', space=smem, size = 0x200, scoped, tag = 'scoped memory for tpu_custom_call.1']
  %s0 = inlined_call_operand.hbm [shape: f32[2,8,256], index: 0, kind: input, shape index: {}]
  %s1 = inlined_call_operand.vmem [shape: bf16[2,8,64], index: 1, kind: input, shape index: {}]
  %s2 = inlined_call_operand.hbm [shape: bf16[2,16,64], index: 2, kind: input, shape index: {}]
  %s3 = inlined_call_operand.vmem [shape: bf16[8,8], index: 3, kind: input, shape index: {}]
  %s4 = inlined_call_operand.vmem [shape: f32[8,1], index: 4, kind: input, shape index: {}]
  %s5 = inlined_call_operand.<no memory space> [shape: f32[1], index: 5, kind: input, shape index: {}]
  %s6 = inlined_call_operand.hbm [shape: f32[2,8,256], index: 6, kind: output, shape index: {}]
  %s7 = sld [smem:[#allocation0]]
  $region65: #{tpu_custom_call.1} parent=0
    _
  %s9 = ssub.s32 1, %s7
  %s10 = scalar_select 0, %s9, %s7
  %11 = sst [smem:[#allocation2]] %s5
  $region1: #{tpu_custom_call.1} parent=0
    #allocation3 [shape = 'u8[8192]{0}', space=vmem, size = 0x2000, scoped, tag = 'input window, operand 0']
    #allocation4 [shape = 's32[2]{0}', space=sflag, size = 0x8, scoped, tag = 'scoped memory for tpu_custom_call.1']
    #allocation5 [shape = 's32[2]{0}', space=sflag, size = 0x8, scoped, tag = 'scoped memory for tpu_custom_call.1']
    #allocation6 [shape = 'u8[8192]{0}', space=vmem, size = 0x2000, scoped, tag = 'input window, operand 2']
    #allocation7 [shape = 's32[2]{0}', space=sflag, size = 0x8, scoped, tag = 'scoped memory for tpu_custom_call.1']
    #allocation8 [shape = 'u8[8192]{0}', space=vmem, size = 0x2000, scoped, tag = 'output window, operand 0']
    %12 = vsyncpa [#allocation4], 0
    %s13 = scalar_lea.sflag [#allocation4], 1
    %14 = vsyncpa %s13, 0
    %15 = vsyncpa [#allocation7], 0
    %s16 = scalar_lea.sflag [#allocation7], 1
    %17 = vsyncpa %s16, 0
    %18 = vsyncpa [#allocation5], 0
    %s19 = scalar_lea.sflag [#allocation5], 1
    %20 = vsyncpa %s19, 0
    loop: start=0, step=1, limit=6
    $region2: #{tpu_custom_call.1} parent=1 // loop_pre_header
      _
    $region3: #{tpu_custom_call.1} parent=1 // loop_header
      %s22 = sphi 0, %s26
      %p23 = scmp.ge.s32.totalorder %s22, 6
      %s29 = sphi 0, %s41
      %s30 = sphi 0, %s37
      %s31 = sphi 0, %s29
      %s32 = sphi 0, %s30
      %s33 = sphi 0, %s31
      %s34 = sphi 0, %s32
      %s46 = sphi 0, %s48
      %s49 = sphi 0, %s46
      %s50 = sphi 0, %s49
      %s66 = sphi 0, %s50
      %s72 = sphi 0, %s74
      %s75 = sphi 0, %s72
      %s76 = sphi 0, %s75
      %s92 = sphi 0, %s76
      %s98 = sphi 0, %s100
      %s101 = sphi 0, %s98
      %s102 = sphi 0, %s101
      %s118 = sphi 0, %s102
      %s122 = sphi 0, %s122
      %s124 = sphi 0, %s122
      %s125 = sphi 0, %s124
      %s139 = sphi 0, %s125
      %s143 = sphi 0, %s143
      %s145 = sphi 0, %s143
      %s146 = sphi 0, %s145
      %s160 = sphi 0, %s146
      %s164 = sphi 0, %s164
      %s166 = sphi 0, %s164
      %s167 = sphi 0, %s166
      %s181 = sphi 0, %s167
      %s189 = sphi 0, %s191
      %s192 = sphi 0, %s189
      %s193 = sphi 0, %s192
      %s209 = sphi 0, %s193
    $region4: #{tpu_custom_call.1} parent=1 // loop_header_branch
      %25 = sbr.rel (%p23) target = $region8
    $region5: #{tpu_custom_call.1} parent=1 // loop_body
      %s27 = ssub.s32 %s22, 1
      %s28 = ssub.s32 %s22, 2
      %s35 = sadd.s32 1, %s30
      %p36 = scmp.ge.s32.totalorder %s35, 2
      %s37 = scalar_select %p36, 0, %s35
      %s38 = sadd.s32 1, %s29
      %s39 = scalar_select %p36, %s38, %s29
      %p40 = scmp.ge.s32.totalorder %s39, 2
      %s41 = scalar_select %p40, 0, %s39
      %s42 = ssub.s32 %s29, %s41
      %s43 = ssub.s32 %s30, %s37
      %s44 = sor.u32 %s42, %s43
      %p45 = scmp.eq.s32.totalorder %s44, 0
      %s47 = sadd.s32 %s46, 1
      %s48 = scalar_select %p45, %s46, %s47
      %p51 = pneg %p45
      %p52 = scmp.eq.s32.totalorder %s22, 3
      %p53 = por %p51, %p52
      %p54 = scmp.ne.s32.totalorder %s46, %s49
      %p55 = scmp.eq.s32.totalorder %s22, 0
      %p56 = por %p54, %p55
      %p57 = scmp.ne.s32.totalorder %s46, %s49
      %p58 = scmp.eq.s32.totalorder %s27, 3
      %p59 = por %p57, %p58
      %p60 = scmp.ne.s32.totalorder %s49, %s50
      %p61 = scmp.eq.s32.totalorder %s27, 0
      %p62 = por %p60, %p61
      %p63 = scmp.ne.s32.totalorder %s49, %s50
      %p64 = scmp.eq.s32.totalorder %s28, 3
      %p65 = por %p63, %p64
      %p67 = scmp.ne.s32.totalorder %s50, %s66
      %p68 = scmp.eq.s32.totalorder %s28, 0
      %p69 = por %p67, %p68
      %s70 = ssub.s32 %s29, %s41
      %p71 = scmp.eq.s32.totalorder %s70, 0
      %s73 = sadd.s32 %s72, 1
      %s74 = scalar_select %p71, %s72, %s73
      %p77 = pneg %p71
      %p78 = scmp.eq.s32.totalorder %s22, 3
      %p79 = por %p77, %p78
      %p80 = scmp.ne.s32.totalorder %s72, %s75
      %p81 = scmp.eq.s32.totalorder %s22, 0
      %p82 = por %p80, %p81
      %p83 = scmp.ne.s32.totalorder %s72, %s75
      %p84 = scmp.eq.s32.totalorder %s27, 3
      %p85 = por %p83, %p84
      %p86 = scmp.ne.s32.totalorder %s75, %s76
      %p87 = scmp.eq.s32.totalorder %s27, 0
      %p88 = por %p86, %p87
      %p89 = scmp.ne.s32.totalorder %s75, %s76
      %p90 = scmp.eq.s32.totalorder %s28, 3
      %p91 = por %p89, %p90
      %p93 = scmp.ne.s32.totalorder %s76, %s92
      %p94 = scmp.eq.s32.totalorder %s28, 0
      %p95 = por %p93, %p94
      %s96 = ssub.s32 %s29, %s41
      %p97 = scmp.eq.s32.totalorder %s96, 0
      %s99 = sadd.s32 %s98, 1
      %s100 = scalar_select %p97, %s98, %s99
      %p103 = pneg %p97
      %p104 = scmp.eq.s32.totalorder %s22, 3
      %p105 = por %p103, %p104
      %p106 = scmp.ne.s32.totalorder %s98, %s101
      %p107 = scmp.eq.s32.totalorder %s22, 0
      %p108 = por %p106, %p107
      %p109 = scmp.ne.s32.totalorder %s98, %s101
      %p110 = scmp.eq.s32.totalorder %s27, 3
      %p111 = por %p109, %p110
      %p112 = scmp.ne.s32.totalorder %s101, %s102
      %p113 = scmp.eq.s32.totalorder %s27, 0
      %p114 = por %p112, %p113
      %p115 = scmp.ne.s32.totalorder %s101, %s102
      %p116 = scmp.eq.s32.totalorder %s28, 3
      %p117 = por %p115, %p116
      %p119 = scmp.ne.s32.totalorder %s102, %s118
      %p120 = scmp.eq.s32.totalorder %s28, 0
      %p121 = por %p119, %p120
      %s123 = sadd.s32 %s122, 1
      %p126 = scmp.eq.s32.totalorder %s22, 3
      %p127 = scmp.ne.s32.totalorder %s122, %s124
      %p128 = scmp.eq.s32.totalorder %s22, 0
      %p129 = por %p127, %p128
      %p130 = scmp.ne.s32.totalorder %s122, %s124
      %p131 = scmp.eq.s32.totalorder %s27, 3
      %p132 = por %p130, %p131
      %p133 = scmp.ne.s32.totalorder %s124, %s125
      %p134 = scmp.eq.s32.totalorder %s27, 0
      %p135 = por %p133, %p134
      %p136 = scmp.ne.s32.totalorder %s124, %s125
      %p137 = scmp.eq.s32.totalorder %s28, 3
      %p138 = por %p136, %p137
      %p140 = scmp.ne.s32.totalorder %s125, %s139
      %p141 = scmp.eq.s32.totalorder %s28, 0
      %p142 = por %p140, %p141
      %s144 = sadd.s32 %s143, 1
      %p147 = scmp.eq.s32.totalorder %s22, 3
      %p148 = scmp.ne.s32.totalorder %s143, %s145
      %p149 = scmp.eq.s32.totalorder %s22, 0
      %p150 = por %p148, %p149
      %p151 = scmp.ne.s32.totalorder %s143, %s145
      %p152 = scmp.eq.s32.totalorder %s27, 3
      %p153 = por %p151, %p152
      %p154 = scmp.ne.s32.totalorder %s145, %s146
      %p155 = scmp.eq.s32.totalorder %s27, 0
      %p156 = por %p154, %p155
      %p157 = scmp.ne.s32.totalorder %s145, %s146
      %p158 = scmp.eq.s32.totalorder %s28, 3
      %p159 = por %p157, %p158
      %p161 = scmp.ne.s32.totalorder %s146, %s160
      %p162 = scmp.eq.s32.totalorder %s28, 0
      %p163 = por %p161, %p162
      %s165 = sadd.s32 %s164, 1
      %p168 = scmp.eq.s32.totalorder %s22, 3
      %p169 = scmp.ne.s32.totalorder %s164, %s166
      %p170 = scmp.eq.s32.totalorder %s22, 0
      %p171 = por %p169, %p170
      %p172 = scmp.ne.s32.totalorder %s164, %s166
      %p173 = scmp.eq.s32.totalorder %s27, 3
      %p174 = por %p172, %p173
      %p175 = scmp.ne.s32.totalorder %s166, %s167
      %p176 = scmp.eq.s32.totalorder %s27, 0
      %p177 = por %p175, %p176
      %p178 = scmp.ne.s32.totalorder %s166, %s167
      %p179 = scmp.eq.s32.totalorder %s28, 3
      %p180 = por %p178, %p179
      %p182 = scmp.ne.s32.totalorder %s167, %s181
      %p183 = scmp.eq.s32.totalorder %s28, 0
      %p184 = por %p182, %p183
      %s185 = ssub.s32 %s29, %s41
      %s186 = ssub.s32 %s30, %s37
      %s187 = sor.u32 %s185, %s186
      %p188 = scmp.eq.s32.totalorder %s187, 0
      %s190 = sadd.s32 %s189, 1
      %s191 = scalar_select %p188, %s189, %s190
      %p194 = pneg %p188
      %p195 = scmp.eq.s32.totalorder %s22, 3
      %p196 = por %p194, %p195
      %p197 = scmp.ne.s32.totalorder %s189, %s192
      %p198 = scmp.eq.s32.totalorder %s22, 0
      %p199 = por %p197, %p198
      %p200 = scmp.ne.s32.totalorder %s189, %s192
      %p201 = scmp.eq.s32.totalorder %s27, 3
      %p202 = por %p200, %p201
      %p203 = scmp.ne.s32.totalorder %s192, %s193
      %p204 = scmp.eq.s32.totalorder %s27, 0
      %p205 = por %p203, %p204
      %p206 = scmp.ne.s32.totalorder %s192, %s193
      %p207 = scmp.eq.s32.totalorder %s28, 3
      %p208 = por %p206, %p207
      %p210 = scmp.ne.s32.totalorder %s193, %s209
      %p211 = scmp.eq.s32.totalorder %s28, 0
      %p212 = por %p210, %p211
      %p213 = scmp.le.s32.totalorder 1, %s22
      %p214 = scmp.lt.s32.totalorder %s22, 5
      %p215 = pnand %p213, %p214
      %p216 = pneg %p215
      // Predicated region
      $region9: #{tpu_custom_call.1} parent=5 // pred_check
        _
      $region10: #{tpu_custom_call.1} parent=5 // pred_check_branch
        %218 = sbr.rel (%p215) target = $region12
      $region11: #{tpu_custom_call.1} parent=5 // pred_region
        %s219 = ssub.s32 %s22, 1
        // Predicated region
        $region13: #{tpu_custom_call.1} parent=11 // pred_check
          %p220 = pneg %p135
        $region14: #{tpu_custom_call.1} parent=11 // pred_check_branch
          %222 = sbr.rel (%p220) target = $region16
        $region15: #{tpu_custom_call.1} parent=11 // pred_region
          _
        $region16: #{tpu_custom_call.1} parent=11 // pred_fallthru
          _
        // Predicated region
        $region17: #{tpu_custom_call.1} parent=11 // pred_check
          %p223 = pneg %p156
        $region18: #{tpu_custom_call.1} parent=11 // pred_check_branch
          %225 = sbr.rel (%p223) target = $region20
        $region19: #{tpu_custom_call.1} parent=11 // pred_region
          _
        $region20: #{tpu_custom_call.1} parent=11 // pred_fallthru
          _
        // Predicated region
        $region21: #{tpu_custom_call.1} parent=11 // pred_check
          %p226 = pneg %p177
        $region22: #{tpu_custom_call.1} parent=11 // pred_check_branch
          %228 = sbr.rel (%p226) target = $region24
        $region23: #{tpu_custom_call.1} parent=11 // pred_region
          _
        $region24: #{tpu_custom_call.1} parent=11 // pred_fallthru
          _
      $region12: #{tpu_custom_call.1} parent=5 // pred_fallthru
        _
      %p229 = scmp.lt.s32.totalorder %s22, 4
      // Predicated region
      $region25: #{tpu_custom_call.1} parent=5 // pred_check
        %p230 = pneg %p229
      $region26: #{tpu_custom_call.1} parent=5 // pred_check_branch
        %232 = sbr.rel (%p230) target = $region28
      $region27: #{tpu_custom_call.1} parent=5 // pred_region
        // Predicated region
        $region29: #{tpu_custom_call.1} parent=27 // pred_check
          %p233 = pneg %p56
        $region30: #{tpu_custom_call.1} parent=27 // pred_check_branch
          %235 = sbr.rel (%p233) target = $region32
        $region31: #{tpu_custom_call.1} parent=27 // pred_region
          %s236 = sand.u32 %s46, 1
          %s237 = scalar_lea.sflag [#allocation4], %s236
          %s238 = sand.u32 %s46, 1
          %s239 = smul.addr %s238, 8
          %s240 = scalar_lea.vmem [#allocation3], %s239
          %s242 = ssub.s32 128, 128
          %243 = vsyncadd %s237, %s242
          %s244 = smul.addr %s29, 2
          %s245 = sadd.s32 %s30, %s244
          %s246 = smul.addr %s245, 128
          %s247 = scalar_lea.hbm %s0, %s246
          %s249 = sshll.u32 %s240, 4
          %s250 = int_to_ptr.vmem [resolvable:$true] %s249
          %252 = dma.hbm_to_vmem [thread:$0]  %s247, 128, %s250, %s237
        $region32: #{tpu_custom_call.1} parent=27 // pred_fallthru
          _
        // Predicated region
        $region33: #{tpu_custom_call.1} parent=27 // pred_check
          %p253 = pneg %p82
        $region34: #{tpu_custom_call.1} parent=27 // pred_check_branch
          %255 = sbr.rel (%p253) target = $region36
        $region35: #{tpu_custom_call.1} parent=27 // pred_region
          %p256 = scmp.lt.s32.totalorder %s29, 1
          %s257 = scalar_select %p256, %s29, 1
          %s258 = smul.addr %s257, 4
          %s259 = scalar_lea.vmem %s1, %s258
        $region36: #{tpu_custom_call.1} parent=27 // pred_fallthru
          _
        // Predicated region
        $region37: #{tpu_custom_call.1} parent=27 // pred_check
          %p260 = pneg %p108
        $region38: #{tpu_custom_call.1} parent=27 // pred_check_branch
          %262 = sbr.rel (%p260) target = $region40
        $region39: #{tpu_custom_call.1} parent=27 // pred_region
          %s263 = sand.u32 %s98, 1
          %s264 = scalar_lea.sflag [#allocation7], %s263
          %s265 = sand.u32 %s98, 1
          %s266 = smul.addr %s265, 8
          %s267 = scalar_lea.vmem [#allocation6], %s266
          %s269 = ssub.s32 128, 128
          %270 = vsyncadd %s264, %s269
          %s271 = smul.addr %s29, 2
          %s272 = smul.addr %s271, 64
          %s273 = scalar_lea.hbm %s2, %s272
          %s274 = sshll.u32 %s267, 4
          %s275 = int_to_ptr.vmem [resolvable:$true] %s274
          %280 = dma.hbm_to_vmem [thread:$0]  %s273, 128, %s275, %s264, 64, 64, 4
        $region40: #{tpu_custom_call.1} parent=27 // pred_fallthru
          _
      $region28: #{tpu_custom_call.1} parent=5 // pred_fallthru
        _
      %p281 = scmp.le.s32.totalorder 1, %s22
      %p282 = scmp.lt.s32.totalorder %s22, 5
      %p283 = pnand %p281, %p282
      %p284 = pneg %p283
      // Predicated region
      $region41: #{tpu_custom_call.1} parent=5 // pred_check
        _
      $region42: #{tpu_custom_call.1} parent=5 // pred_check_branch
        %286 = sbr.rel (%p283) target = $region44
      $region43: #{tpu_custom_call.1} parent=5 // pred_region
        %s287 = ssub.s32 %s22, 1
        %s288 = sand.u32 %s49, 1
        %s289 = scalar_lea.sflag [#allocation4], %s288
        %s290 = sand.u32 %s49, 1
        %s291 = smul.addr %s290, 8
        %s292 = scalar_lea.vmem [#allocation3], %s291
        // Predicated region
        $region45: #{tpu_custom_call.1} parent=43 // pred_check
          %p293 = pneg %p62
        $region46: #{tpu_custom_call.1} parent=43 // pred_check_branch
          %295 = sbr.rel (%p293) target = $region48
        $region47: #{tpu_custom_call.1} parent=43 // pred_region
          %296 = dma.done %s289, 128
        $region48: #{tpu_custom_call.1} parent=43 // pred_fallthru
          _
        %s297 = sand.u32 %s101, 1
        %s298 = scalar_lea.sflag [#allocation7], %s297
        %s299 = sand.u32 %s101, 1
        %s300 = smul.addr %s299, 8
        %s301 = scalar_lea.vmem [#allocation6], %s300
        // Predicated region
        $region49: #{tpu_custom_call.1} parent=43 // pred_check
          %p302 = pneg %p114
        $region50: #{tpu_custom_call.1} parent=43 // pred_check_branch
          %304 = sbr.rel (%p302) target = $region52
        $region51: #{tpu_custom_call.1} parent=43 // pred_region
          %305 = dma.done %s298, 128
        $region52: #{tpu_custom_call.1} parent=43 // pred_fallthru
          _
        %s306 = sand.u32 %s49, 1
        %s307 = scalar_lea.sflag [#allocation4], %s306
        %s308 = sand.u32 %s49, 1
        %s309 = smul.addr %s308, 8
        %s310 = scalar_lea.vmem [#allocation3], %s309
        %p311 = pneg %p62
        %p312 = pneg %p59
        %p313 = scmp.lt.s32.totalorder %s31, 1
        %s314 = scalar_select %p313, %s31, 1
        %s315 = smul.addr %s314, 4
        %s316 = scalar_lea.vmem %s1, %s315
        %p317 = pneg %p88
        %p318 = pneg %p85
        %s319 = sand.u32 %s101, 1
        %s320 = scalar_lea.sflag [#allocation7], %s319
        %s321 = sand.u32 %s101, 1
        %s322 = smul.addr %s321, 8
        %s323 = scalar_lea.vmem [#allocation6], %s322
        %p324 = pneg %p114
        %p325 = pneg %p111
        %p326 = pneg %p135
        %p327 = pneg %p132
        %p328 = pneg %p156
        %p329 = pneg %p153
        %p330 = pneg %p177
        %p331 = pneg %p174
        %p332 = pneg %p205
        %p333 = pneg %p202
        %s334 = sand.u32 %s192, 1
        %s335 = scalar_lea.sflag [#allocation5], %s334
        %s336 = sand.u32 %s192, 1
        %s337 = smul.addr %s336, 8
        %s338 = scalar_lea.vmem [#allocation8], %s337
        %p339 = scmp.lt.s32.totalorder %s31, 1
        %s340 = scalar_select %p339, %s31, 1
        %s341 = smul.addr %s340, 4
        %s342 = scalar_lea.vmem %s1, %s341
        %v344 = vld [vmem:[%s292] sm:$0xff]
        %v345 = vld [vmem:[%s3] sm:$0xf]
        %v346 = vpack.c.bf16 %v344, %v344
        %v347 = vld [vmem:[%s4] sm:$0xff]
        %349 = vset.pattern.permute.xlu0 0
        %350 = vperm.xlu0 %349, %v347
        %v351 = vpop.permute.xlu0 %350
        %vm353 = vcmask 64512
        %v355 = vsel %vm353, %v345, 0
        %vm357 = vcmask 1043456
        %v359 = vsel %vm357, %v346, 0
        %361 = vmatprep.subr.bf16.mxu0 0
        %362 = vmatpush1.bf16.msra.mxu0 %v359
        %363 = vmatprep.subr.bf16.mxu0 0
        %364 = vmatpush1.bf16.msra.mxu0 0
        %365 = vmatprep.subr.bf16.mxu0 0
        %366 = vmatpush1.bf16.msra.mxu0 0
        %367 = vmatprep.subr.bf16.mxu0 0
        %368 = vmatpush1.bf16.msra.mxu0 0
        %369 = vmatprep.subr.bf16.mxu0 0
        %370 = vmatpush1.bf16.msra.mxu0 0
        %371 = vmatprep.subr.bf16.mxu0 0
        %372 = vmatpush1.bf16.msra.mxu0 0
        %373 = vmatprep.subr.bf16.mxu0 0
        %374 = vmatpush1.bf16.msra.mxu0 0
        %375 = vmatprep.subr.bf16.mxu0 0
        %376 = vmatpush1.bf16.msra.mxu0 0
        %377 = vmatprep.subr.bf16.mxu0 0
        %378 = vmatpush1.bf16.msra.mxu0 0
        %379 = vmatprep.subr.bf16.mxu0 0
        %380 = vmatpush1.bf16.msra.mxu0 0
        %381 = vmatprep.subr.bf16.mxu0 0
        %382 = vmatpush1.bf16.msra.mxu0 0
        %383 = vmatprep.subr.bf16.mxu0 0
        %384 = vmatpush1.bf16.msra.mxu0 0
        %385 = vmatprep.subr.bf16.mxu0 0
        %386 = vmatpush1.bf16.msra.mxu0 0
        %387 = vmatprep.subr.bf16.mxu0 0
        %388 = vmatpush1.bf16.msra.mxu0 0
        %389 = vmatprep.subr.bf16.mxu0 0
        %390 = vmatpush1.bf16.msra.mxu0 0
        %391 = vmatprep.subr.bf16.mxu0 0
        %392 = vmatpush1.bf16.msra.mxu0 0
        %393 = vmatprep.mubr.bf16.mxu0 0
        %394 = vmatmul.mubr.bf16.gmra.mrb[0].mxu0 %v355
        %v395 = vpop.f32.mrb[0].mxu0
        %v396 = vadd.f32 %v351, %v395
        %v397 = vpop.f32.mrb[0].mxu0
        %v398 = vpop.f32.mrb[0].mxu0
        %v399 = vpop.f32.mrb[0].mxu0
        %400 = vdwg.mxu0
        %v401 = vmul.f32 %v396, 0.5
        %v402 = vpack.c.bf16 %v401, %v401
        %v403 = vld [vmem:[%s342] sm:$0xf]
        %404 = vxpose.xlu0.c.b16.start [1/8] %v403, 128
        %405 = vxpose.xlu0.c.b16.cont [2/8] 0, 128
        %406 = vxpose.xlu0.c.b16.cont [3/8] 0, 128
        %407 = vxpose.xlu0.c.b16.cont [4/8] 0, 128
        %408 = vxpose.xlu0.c.b16.cont [5/8] 0, 128
        %409 = vxpose.xlu0.c.b16.cont [6/8] 0, 128
        %410 = vxpose.xlu0.c.b16.cont [7/8] 0, 128
        %411 = vxpose.xlu0.c.b16.end [8/8] 0, 128
        %v412 = vpop.trf.xlu0
        %v413 = vpop.trf.xlu0
        %v414 = vpop.trf.xlu0
        %v415 = vpop.trf.xlu0
        %v416 = vpop.trf.xlu0
        %v417 = vpop.trf.xlu0
        %v418 = vpop.trf.xlu0
        %v419 = vpop.trf.xlu0
        %v421 = vsel %vm353, %v412, 0
        %v424 = vsel %vm353, %v413, 0
        %v427 = vsel %vm353, %v414, 0
        %v430 = vsel %vm353, %v415, 0
        %v433 = vsel %vm357, %v402, 0
        %435 = vmatprep.subr.bf16.mxu0 0
        %436 = vmatpush1.bf16.msra.mxu0 %v433
        %437 = vmatprep.subr.bf16.mxu0 0
        %438 = vmatpush1.bf16.msra.mxu0 0
        %439 = vmatprep.subr.bf16.mxu0 0
        %440 = vmatpush1.bf16.msra.mxu0 0
        %441 = vmatprep.subr.bf16.mxu0 0
        %442 = vmatpush1.bf16.msra.mxu0 0
        %443 = vmatprep.subr.bf16.mxu0 0
        %444 = vmatpush1.bf16.msra.mxu0 0
        %445 = vmatprep.subr.bf16.mxu0 0
        %446 = vmatpush1.bf16.msra.mxu0 0
        %447 = vmatprep.subr.bf16.mxu0 0
        %448 = vmatpush1.bf16.msra.mxu0 0
        %449 = vmatprep.subr.bf16.mxu0 0
        %450 = vmatpush1.bf16.msra.mxu0 0
        %451 = vmatprep.subr.bf16.mxu0 0
        %452 = vmatpush1.bf16.msra.mxu0 0
        %453 = vmatprep.subr.bf16.mxu0 0
        %454 = vmatpush1.bf16.msra.mxu0 0
        %455 = vmatprep.subr.bf16.mxu0 0
        %456 = vmatpush1.bf16.msra.mxu0 0
        %457 = vmatprep.subr.bf16.mxu0 0
        %458 = vmatpush1.bf16.msra.mxu0 0
        %459 = vmatprep.subr.bf16.mxu0 0
        %460 = vmatpush1.bf16.msra.mxu0 0
        %461 = vmatprep.subr.bf16.mxu0 0
        %462 = vmatpush1.bf16.msra.mxu0 0
        %463 = vmatprep.subr.bf16.mxu0 0
        %464 = vmatpush1.bf16.msra.mxu0 0
        %465 = vmatprep.subr.bf16.mxu0 0
        %466 = vmatpush1.bf16.msra.mxu0 0
        %467 = vmatprep.mubr.bf16.mxu0 0
        %468 = vmatmul.mubr.bf16.gmra.mrb[0].mxu0 %v421
        %v469 = vpop.f32.mrb[0].mxu0
        %v470 = vadd.f32 0.0, %v469
        %v471 = vpop.f32.mrb[0].mxu0
        %v472 = vpop.f32.mrb[0].mxu0
        %v473 = vadd.f32 0.0, %v472
        %v474 = vpop.f32.mrb[0].mxu0
        %475 = vmatprep.mubr.bf16.mxu0 0
        %476 = vmatmul.mubr.bf16.gmra.mrb[0].mxu0 %v424
        %v477 = vpop.f32.mrb[0].mxu0
        %v478 = vadd.f32 0.0, %v477
        %v479 = vpop.f32.mrb[0].mxu0
        %v480 = vpop.f32.mrb[0].mxu0
        %v481 = vadd.f32 0.0, %v480
        %v482 = vpop.f32.mrb[0].mxu0
        %483 = vmatprep.mubr.bf16.mxu0 0
        %484 = vmatmul.mubr.bf16.gmra.mrb[0].mxu0 %v427
        %v485 = vpop.f32.mrb[0].mxu0
        %v486 = vadd.f32 0.0, %v485
        %v487 = vpop.f32.mrb[0].mxu0
        %v488 = vpop.f32.mrb[0].mxu0
        %v489 = vadd.f32 0.0, %v488
        %v490 = vpop.f32.mrb[0].mxu0
        %491 = vmatprep.mubr.bf16.mxu0 0
        %492 = vmatmul.mubr.bf16.gmra.mrb[0].mxu0 %v430
        %v493 = vpop.f32.mrb[0].mxu0
        %v494 = vadd.f32 0.0, %v493
        %v495 = vpop.f32.mrb[0].mxu0
        %v496 = vpop.f32.mrb[0].mxu0
        %v497 = vadd.f32 0.0, %v496
        %v498 = vpop.f32.mrb[0].mxu0
        %499 = vdwg.mxu0
        %v500 = vmax.f32 %v470, %v486
        %v501 = vmax.f32 %v473, %v489
        %v502 = vmax.f32 %v478, %v494
        %v503 = vmax.f32 %v481, %v497
        %v504 = vmax.f32 %v500, %v501
        %v505 = vmax.f32 %v502, %v503
        %v506 = vmax.f32 %v504, %v505
        %v507 = vrot.slane %v506, 4
        %v508 = vmax.f32 %v506, %v507
        %v509 = vrot.slane %v508, 2
        %v510 = vmax.f32 %v508, %v509
        %v511 = vrot.slane %v510, 1
        %v512 = vmax.f32 %v510, %v511
        %v513 = vsub.f32 %v470, %v512
        %v514 = vsub.f32 %v473, %v512
        %v515 = vsub.f32 %v478, %v512
        %v516 = vsub.f32 %v481, %v512
        %v517 = vsub.f32 %v486, %v512
        %v518 = vsub.f32 %v489, %v512
        %v519 = vsub.f32 %v494, %v512
        %v520 = vsub.f32 %v497, %v512
        %v521 = vmul.f32 %v513, 1.442695
        %v522 = vpow.pop %v521
        %v523 = vmul.f32 %v514, 1.442695
        %v524 = vpow.pop %v523
        %v525 = vmul.f32 %v515, 1.442695
        %v526 = vpow.pop %v525
        %v527 = vmul.f32 %v516, 1.442695
        %v528 = vpow.pop %v527
        %v529 = vmul.f32 %v517, 1.442695
        %v530 = vpow.pop %v529
        %v531 = vmul.f32 %v518, 1.442695
        %v532 = vpow.pop %v531
        %v533 = vmul.f32 %v519, 1.442695
        %v534 = vpow.pop %v533
        %v535 = vmul.f32 %v520, 1.442695
        %v536 = vpow.pop %v535
        %v537 = vpack.c.bf16 %v524, %v522
        %v538 = vpack.c.bf16 %v528, %v526
        %v539 = vpack.c.bf16 %v532, %v530
        %v540 = vpack.c.bf16 %v536, %v534
        %v541 = vld [vmem:[%s301] sm:$0xf]
        %v542 = vld [vmem:[%s301 + $0x4] sm:$0xf]
        %v545 = vunpack.c.l.b16 %v541
        %v546 = vunpack.c.l.b16 %v542
        %v547 = vpack.c.b16 %v546, %v545
        %vm548 = vcmask 523264
        %v550 = vsel %vm548, %v547, 0
        %552 = vmatprep.subr.bf16.mxu0 0
        %553 = vmatpush1.bf16.msra.mxu0 %v537
        %554 = vmatprep.subr.bf16.mxu0 0
        %555 = vmatpush1.bf16.msra.mxu0 %v538
        %556 = vmatprep.subr.bf16.mxu0 0
        %557 = vmatpush1.bf16.msra.mxu0 %v539
        %558 = vmatprep.subr.bf16.mxu0 0
        %559 = vmatpush1.bf16.msra.mxu0 %v540
        %560 = vmatprep.subr.bf16.mxu0 0
        %561 = vmatpush1.bf16.msra.mxu0 0
        %562 = vmatprep.subr.bf16.mxu0 0
        %563 = vmatpush1.bf16.msra.mxu0 0
        %564 = vmatprep.subr.bf16.mxu0 0
        %565 = vmatpush1.bf16.msra.mxu0 0
        %566 = vmatprep.subr.bf16.mxu0 0
        %567 = vmatpush1.bf16.msra.mxu0 0
        %568 = vmatprep.subr.bf16.mxu0 0
        %569 = vmatpush1.bf16.msra.mxu0 0
        %570 = vmatprep.subr.bf16.mxu0 0
        %571 = vmatpush1.bf16.msra.mxu0 0
        %572 = vmatprep.subr.bf16.mxu0 0
        %573 = vmatpush1.bf16.msra.mxu0 0
        %574 = vmatprep.subr.bf16.mxu0 0
        %575 = vmatpush1.bf16.msra.mxu0 0
        %576 = vmatprep.subr.bf16.mxu0 0
        %577 = vmatpush1.bf16.msra.mxu0 0
        %578 = vmatprep.subr.bf16.mxu0 0
        %579 = vmatpush1.bf16.msra.mxu0 0
        %580 = vmatprep.subr.bf16.mxu0 0
        %581 = vmatpush1.bf16.msra.mxu0 0
        %582 = vmatprep.subr.bf16.mxu0 0
        %583 = vmatpush1.bf16.msra.mxu0 0
        %584 = vmatprep.mubr.bf16.mxu0 0
        %585 = vmatmul.mubr.bf16.gmra.mrb[0].mxu0 %v550
        %v586 = vpop.f32.mrb[0].mxu0
        %v587 = vadd.f32 0.0, %v586
        %v588 = vpop.f32.mrb[0].mxu0
        %v589 = vpop.f32.mrb[0].mxu0
        %v590 = vadd.f32 0.0, %v589
        %v591 = vpop.f32.mrb[0].mxu0
        %592 = vdwg.mxu0
        %s593 = sld [smem:[#allocation2]]
        %v594 = vrcp.pop %v590
        %v595 = vstv %s593
        %v596 = vmul.f32 %v595, %v594
        %v597 = vlaneseq
        %v598 = vshrl.u32 %v597, 7
        %v599 = vsub.s32 0, %v598
        %v600 = vrot.slane %v596, %v599
        %v601 = vmul.f32 %v587, %v600
        %v602 = vadd.f32 %v601, %v344
        %603 = vst [vmem:[%s338] sm:$0xff] %v602
        %s604 = sand.u32 %s192, 1
        %s605 = scalar_lea.sflag [#allocation5], %s604
        %s606 = sand.u32 %s192, 1
        %s607 = smul.addr %s606, 8
        %s608 = scalar_lea.vmem [#allocation8], %s607
        // Predicated region
        $region53: #{tpu_custom_call.1} parent=43 // pred_check
          %p609 = pneg %p202
        $region54: #{tpu_custom_call.1} parent=43 // pred_check_branch
          %611 = sbr.rel (%p609) target = $region56
        $region55: #{tpu_custom_call.1} parent=43 // pred_region
          %s613 = ssub.s32 128, 128
          %614 = vsyncadd %s605, %s613
          %s615 = smul.addr %s31, 2
          %s616 = sadd.s32 %s32, %s615
          %s617 = smul.addr %s616, 128
          %s618 = scalar_lea.hbm %s6, %s617
          %s620 = sshll.u32 %s608, 4
          %s621 = int_to_ptr.vmem [resolvable:$true] %s620
          %623 = dma.vmem_to_hbm [thread:$0]  %s621, 128, %s618, %s605
        $region56: #{tpu_custom_call.1} parent=43 // pred_fallthru
          _
      $region44: #{tpu_custom_call.1} parent=5 // pred_fallthru
        _
      %p624 = scmp.le.s32.totalorder 2, %s22
      // Predicated region
      $region57: #{tpu_custom_call.1} parent=5 // pred_check
        %p625 = pneg %p624
      $region58: #{tpu_custom_call.1} parent=5 // pred_check_branch
        %627 = sbr.rel (%p625) target = $region60
      $region59: #{tpu_custom_call.1} parent=5 // pred_region
        %s628 = ssub.s32 %s22, 2
        // Predicated region
        $region61: #{tpu_custom_call.1} parent=59 // pred_check
          %p629 = pneg %p208
        $region62: #{tpu_custom_call.1} parent=59 // pred_check_branch
          %631 = sbr.rel (%p629) target = $region64
        $region63: #{tpu_custom_call.1} parent=59 // pred_region
          %s632 = sand.u32 %s193, 1
          %s633 = scalar_lea.sflag [#allocation5], %s632
          %s634 = sand.u32 %s193, 1
          %s635 = smul.addr %s634, 8
          %s636 = scalar_lea.vmem [#allocation8], %s635
          %637 = dma.done %s633, 128
        $region64: #{tpu_custom_call.1} parent=59 // pred_fallthru
          _
      $region60: #{tpu_custom_call.1} parent=5 // pred_fallthru
        _
    $region6: #{tpu_custom_call.1} parent=1 // loop_footer
      %s26 = sadd.s32 1, %s22
    $region7: #{tpu_custom_call.1} parent=1 // loop_footer_branch
      %21 = sbr.rel target = $region3
    $region8: #{tpu_custom_call.1} parent=1 // loop_exit
      _
    %638 = vsyncpa [#allocation4], 1
    %s639 = scalar_lea.sflag [#allocation4], 1
    %640 = vsyncpa %s639, 1
    %641 = vsyncpa [#allocation7], 1
    %s642 = scalar_lea.sflag [#allocation7], 1
    %643 = vsyncpa %s642, 1
    %644 = vsyncpa [#allocation5], 1
    %s645 = scalar_lea.sflag [#allocation5], 1
    %646 = vsyncpa %s645, 1

</llo_original>
